<compile_context>
chip_gen: v5e
topology: v5e:2x2
jax: 0.10.0
libtpu: 0.0.40
codegen_flags: <defaults>
</compile_context>

<pallas_src>
import functools
import math

import jax
import jax.numpy as jnp
from jax import lax
from jax.experimental import pallas as pl
from jax.experimental.pallas import tpu as pltpu


def _device_kind():
    try:
        return str(getattr(jax.devices()[0], "device_kind", "")).lower()
    except Exception:
        return ""


_KIND = _device_kind()
# Two TensorCores per chip only on v7x-class devices; v5e/v6e are single-TC.
_NUM_TC = 2 if ("v7" in _KIND or "7x" in _KIND) else 1


def _pick_tile_rows(itemsize):
    # v6e/v7x: 32 MiB scoped-VMEM default -> 4 MiB/input tiles double-buffered
    # (16 MiB total) are safe.  v5e (16 MiB default) and unknown chips: 1 MiB.
    if ("v6" in _KIND) or ("v7" in _KIND) or ("7x" in _KIND):
        base = 8192
    else:
        base = 2048
    if itemsize <= 2:  # bf16/fp8: keep bytes-per-step constant.
        base *= 2
    return base


def _sqdiff_kernel(ze_ref, zq_ref, partial_ref, acc_ref, *,
                   tile_rows, valid_rows, blocks_per_core, multi_core,
                   any_ragged):
    """Accumulate sum((z_e - z_q)^2) for one core's slice of the row range."""
    if multi_core:
        c = pl.program_id(0)          # core-parallel axis
        i = pl.program_id(1)          # sequential reduction axis
        num_steps = pl.num_programs(1)
    else:
        c = None
        i = pl.program_id(0)
        num_steps = pl.num_programs(0)

    @pl.when(i == 0)
    def _init():
        acc_ref[...] = jnp.zeros_like(acc_ref)

    d = ze_ref[...].astype(jnp.float32) - zq_ref[...].astype(jnp.float32)
    sq = d * d

    def _accumulate(vals):
        # Tree-sum the (tile_rows,128) tile down to one (8,128) vreg with pure
        # VALU vreg+vreg adds (reshape splits the sublane dim on an 8-row
        # boundary, so it is layout-preserving), then add into the tiny acc.
        acc_ref[...] += jnp.sum(vals.reshape(tile_rows // 8, 8, 128), axis=0)

    if not any_ragged:
        _accumulate(sq)
    else:
        logical_block = (c * blocks_per_core + i) if multi_core else i
        block_start = logical_block * tile_rows
        in_bounds = block_start + tile_rows <= valid_rows

        @pl.when(in_bounds)
        def _full():
            _accumulate(sq)

        @pl.when(jnp.logical_not(in_bounds))
        def _ragged():
            # Ragged boundary block or clamped duplicate block: zero rows past
            # the true extent (select BEFORE accumulate; see header note).
            row_ids = block_start + lax.broadcasted_iota(jnp.int32, sq.shape, 0)
            _accumulate(jnp.where(row_ids < valid_rows, sq, 0.0))

    @pl.when(i == num_steps - 1)
    def _finalize():
        partial_ref[0, 0] = jnp.sum(acc_ref[...])


def _vqvae_loss_impl(z_e, z_q, *, beta, num_cores):
    assert z_e.shape == z_q.shape, "z_e and z_q must have identical shapes"
    n_elems = math.prod(z_e.shape)
    f32 = jnp.float32

    flat_e = z_e.reshape(-1)
    flat_q = z_q.reshape(-1)

    # Split into a 1024-aligned main range (kernel) and a <1024-element tail
    # (tiny plain-XLA epilogue) instead of padding full copies of both tensors.
    chunk = 8 * 128
    main = (n_elems // chunk) * chunk
    tail = n_elems - main

    total_sq = jnp.zeros((), f32)
    if tail:
        dt = flat_e[main:].astype(f32) - flat_q[main:].astype(f32)
        total_sq = total_sq + jnp.sum(dt * dt)

    if main:
        e2 = (flat_e[:main] if tail else flat_e).reshape(-1, 128)
        q2 = (flat_q[:main] if tail else flat_q).reshape(-1, 128)
        rows = main // 128                      # multiple of 8 by construction
        assert rows < 2 ** 31                   # int32 row ids in-kernel

        itemsize = max(e2.dtype.itemsize, q2.dtype.itemsize)
        tile_rows = min(rows, _pick_tile_rows(itemsize))
        blocks = -(-rows // tile_rows)

        use_cores = num_cores if (num_cores > 1 and blocks >= 2) else 1
        blocks_per_core = -(-blocks // use_cores)
        multi_core = use_cores > 1
        any_ragged = (rows % tile_rows != 0) or (use_cores * blocks_per_core != blocks)

        kernel = functools.partial(
            _sqdiff_kernel,
            tile_rows=tile_rows,
            valid_rows=rows,
            blocks_per_core=blocks_per_core,
            multi_core=multi_core,
            any_ragged=any_ragged,
        )

        if multi_core:
            grid = (use_cores, blocks_per_core)
            # Clamp so over-shooting (c, i) pairs re-read the last valid block;
            # their contribution is zeroed by the in-kernel row mask.
            in_index_map = lambda c, i: (jnp.minimum(c * blocks_per_core + i, blocks - 1), 0)
            out_index_map = lambda c, i: (c, 0)
            dim_sem = (pltpu.CORE_PARALLEL, pltpu.ARBITRARY)
        else:
            grid = (blocks,)
            in_index_map = lambda i: (i, 0)
            out_index_map = lambda i: (0, 0)
            dim_sem = ("arbitrary",)

        bytes_per_elem = e2.dtype.itemsize + q2.dtype.itemsize
        partials = pl.pallas_call(
            kernel,
            out_shape=jax.ShapeDtypeStruct((use_cores, 1), jnp.float32),
            grid_spec=pltpu.PrefetchScalarGridSpec(
                num_scalar_prefetch=0,
                grid=grid,
                in_specs=[
                    pl.BlockSpec((tile_rows, 128), in_index_map),
                    pl.BlockSpec((tile_rows, 128), in_index_map),
                ],
                out_specs=pl.BlockSpec((1, 1), out_index_map,
                                       memory_space=pltpu.SMEM),
                scratch_shapes=[pltpu.VMEM((8, 128), jnp.float32)],
            ),
            compiler_params=pltpu.CompilerParams(dimension_semantics=dim_sem),
            cost_estimate=pl.CostEstimate(
                flops=3 * main,
                transcendentals=0,
                bytes_accessed=main * bytes_per_elem,
            ),
        )(e2, q2)
        total_sq = total_sq + jnp.sum(partials)

    mse = total_sq / n_elems
    codebook_loss = mse
    commitment_loss = mse
    total_loss = codebook_loss + beta * commitment_loss
    return total_loss, codebook_loss, commitment_loss


_vqvae_loss_jit = functools.partial(
    jax.jit, static_argnames=("beta", "num_cores"))(_vqvae_loss_impl)


def vqvae_loss(z_e, z_q, beta):
    try:
        return _vqvae_loss_jit(z_e, z_q, beta=float(beta), num_cores=_NUM_TC)
    except Exception:
        # Safety net: if the core-parallel build is rejected on this runtime,
        # fall back to the single-core grid (always valid).
        if _NUM_TC == 1:
            raise
        return _vqvae_loss_jit(z_e, z_q, beta=float(beta), num_cores=1)


if __name__ == "__main__":
    key = jax.random.PRNGKey(0)
    k1, k2 = jax.random.split(key)

    # NCHW-style encoder output / quantized output, small synthetic shapes.
    B, C, H, W = 2, 4, 16, 16
    z_e = jax.random.normal(k1, (B, C, H, W), dtype=jnp.float32)
    z_q = jax.random.normal(k2, (B, C, H, W), dtype=jnp.float32)
    beta = 0.25

    total, codebook, commitment = vqvae_loss(z_e, z_q, beta)
    jax.block_until_ready((total, codebook, commitment))

    mse = jnp.mean((z_e - z_q) ** 2)
    ref_total = mse + beta * mse
    assert jnp.allclose(codebook, mse, rtol=1e-4, atol=1e-6)
    assert jnp.allclose(commitment, mse, rtol=1e-4, atol=1e-6)
    assert jnp.allclose(total, ref_total, rtol=1e-4, atol=1e-6)

    # Extra shapes: ragged tail (jnp epilogue path), 1024-multiple, multi-block
    # with a ragged last block (masked path), and a bf16 streaming path.
    test_cases = [
        ((3, 5, 7, 11), jnp.float32),
        ((4600, 128), jnp.float32),
        ((1200, 1300), jnp.float32),
        ((256, 1024), jnp.bfloat16),
    ]
    for idx, (shape, dtype) in enumerate(test_cases):
        ka, kb = jax.random.split(jax.random.PRNGKey(idx + 1))
        a = jax.random.normal(ka, shape, dtype=jnp.float32).astype(dtype)
        b = jax.random.normal(kb, shape, dtype=jnp.float32).astype(dtype)
        t, cb, cm = vqvae_loss(a, b, beta)
        jax.block_until_ready((t, cb, cm))
        m = jnp.mean((a.astype(jnp.float32) - b.astype(jnp.float32)) ** 2)
        assert jnp.allclose(cb, m, rtol=1e-4, atol=1e-6), (shape, dtype)
        assert jnp.allclose(cm, m, rtol=1e-4, atol=1e-6), (shape, dtype)
        assert jnp.allclose(t, m + beta * m, rtol=1e-4, atol=1e-6), (shape, dtype)

    print("KERNEL_OK")
</pallas_src>

<mosaic_0001>
module attributes {stable_mosaic.version = 11 : i64} {
  func.func @_sqdiff_kernel(%arg0: i32, %arg1: memref<16x128xf32, #tpu.memory_space<vmem>>, %arg2: memref<16x128xf32, #tpu.memory_space<vmem>>, %arg3: memref<1x1xf32, #tpu.memory_space<smem>>, %arg4: memref<8x128xf32, #tpu.memory_space<vmem>>) attributes {dimension_semantics = [#tpu.dimension_semantics<arbitrary>], iteration_bounds = array<i64: 1>, scalar_prefetch = 0 : i64, scratch_operands = 1 : i64, tpu.core_type = #tpu.core_type<tc>, window_params = [{transform_indices = @transform_0, window_bounds = array<i64: 16, 128>}, {transform_indices = @transform_1, window_bounds = array<i64: 16, 128>}, {transform_indices = @transform_2, window_bounds = array<i64: 1, 1>}]} {
    %c0_i32 = arith.constant 0 : i32
    %0 = arith.cmpi eq, %arg0, %c0_i32 : i32
    %1 = arith.extui %0 : i1 to i32
    %c0_i32_0 = arith.constant 0 : i32
    %2 = arith.cmpi ne, %1, %c0_i32_0 : i32
    scf.if %2 {
      %cst_10 = arith.constant 0.000000e+00 : f32
      %15 = vector.broadcast %cst_10 : f32 to vector<8x128xf32>
      %c0_11 = arith.constant 0 : index
      %c0_12 = arith.constant 0 : index
      %16 = vector.load %arg4[%c0_11, %c0_12] : memref<8x128xf32, #tpu.memory_space<vmem>>, vector<8x128xf32>
      tpu.vector_store %arg4[%c0_11, %c0_12], %15 {strides = array<i32>} : memref<8x128xf32, #tpu.memory_space<vmem>>, vector<8x128xf32>,
    } else {
    }
    %c0 = arith.constant 0 : index
    %c0_1 = arith.constant 0 : index
    %3 = vector.load %arg1[%c0, %c0_1] : memref<16x128xf32, #tpu.memory_space<vmem>>, vector<16x128xf32>
    %c0_2 = arith.constant 0 : index
    %c0_3 = arith.constant 0 : index
    %4 = vector.load %arg2[%c0_2, %c0_3] : memref<16x128xf32, #tpu.memory_space<vmem>>, vector<16x128xf32>
    %5 = arith.subf %3, %4 : vector<16x128xf32>
    %6 = arith.mulf %5, %5 : vector<16x128xf32>
    %c0_4 = arith.constant 0 : index
    %c0_5 = arith.constant 0 : index
    %7 = vector.load %arg4[%c0_4, %c0_5] : memref<8x128xf32, #tpu.memory_space<vmem>>, vector<8x128xf32>
    %8 = vector.shape_cast %6 : vector<16x128xf32> to vector<2x8x128xf32>
    %cst = arith.constant dense<0.000000e+00> : vector<8x128xf32>
    %9 = vector.multi_reduction <add>, %8, %cst [0] : vector<2x8x128xf32> to vector<8x128xf32>
    %10 = arith.addf %7, %9 : vector<8x128xf32>
    %c0_6 = arith.constant 0 : index
    %c0_7 = arith.constant 0 : index
    %11 = vector.load %arg4[%c0_6, %c0_7] : memref<8x128xf32, #tpu.memory_space<vmem>>, vector<8x128xf32>
    tpu.vector_store %arg4[%c0_6, %c0_7], %10 {strides = array<i32>} : memref<8x128xf32, #tpu.memory_space<vmem>>, vector<8x128xf32>,
    %c0_i32_8 = arith.constant 0 : i32
    %12 = arith.cmpi eq, %arg0, %c0_i32_8 : i32
    %13 = arith.extui %12 : i1 to i32
    %c0_i32_9 = arith.constant 0 : i32
    %14 = arith.cmpi ne, %13, %c0_i32_9 : i32
    scf.if %14 {
      %c0_10 = arith.constant 0 : index
      %c0_11 = arith.constant 0 : index
      %15 = vector.load %arg4[%c0_10, %c0_11] : memref<8x128xf32, #tpu.memory_space<vmem>>, vector<8x128xf32>
      %16 = vector.shape_cast %15 : vector<8x128xf32> to vector<1x8x128xf32>
      %cst_12 = arith.constant dense<0.000000e+00> : vector<1xf32>
      %17 = vector.multi_reduction <add>, %16, %cst_12 [1, 2] : vector<1x8x128xf32> to vector<1xf32>
      %18 = vector.shape_cast %17 : vector<1xf32> to vector<1x1x1xf32>
      %19 = vector.extract %18[0, 0, 0] : f32 from vector<1x1x1xf32>
      %c0_13 = arith.constant 0 : index
      %c0_14 = arith.constant 0 : index
      %20 = memref.load %arg3[%c0_13, %c0_14] : memref<1x1xf32, #tpu.memory_space<smem>>
      memref.store %19, %arg3[%c0_13, %c0_14] : memref<1x1xf32, #tpu.memory_space<smem>>
    } else {
    }
    return
  }
  func.func @transform_0(%arg0: i32) -> (i32, i32) {
    %c0_i32 = arith.constant 0 : i32
    %c0_i32_0 = arith.constant 0 : i32
    return %arg0, %c0_i32 : i32, i32
  }
  func.func @transform_1(%arg0: i32) -> (i32, i32) {
    %c0_i32 = arith.constant 0 : i32
    %c0_i32_0 = arith.constant 0 : i32
    return %arg0, %c0_i32 : i32, i32
  }
  func.func @transform_2(%arg0: i32) -> (i32, i32) {
    %c0_i32 = arith.constant 0 : i32
    %c0_i32_0 = arith.constant 0 : i32
    %c0_i32_1 = arith.constant 0 : i32
    return %c0_i32, %c0_i32_0 : i32, i32
  }
}

</mosaic_0001>

<llo_original>
// kernel: _vqvae_loss_impl.1
$region0: #{_vqvae_loss_impl.1}
  #allocation0 [shape = 'u32[]', space=smem, size = 0x4, offset = 0x4, fixed_abs, tag = 'smem constant byte address 0x4 - core index']
  #allocation1 [shape = 'u32[72,128]{1,0:T(1,128)}', space=vmem, size = 0x9000, scoped, tag = 'internal scratch']
  #allocation2 [shape = 'f32[8,128]{1,0:T(8,128)}', space=vmem, size = 0x1000, scoped, tag = 'scratch operand']
  %s0 = inlined_call_operand.vmem [shape: f32[16,128], index: 0, kind: input, shape index: {}]
  %s1 = inlined_call_operand.vmem [shape: f32[16,128], index: 1, kind: input, shape index: {}]
  %s2 = inlined_call_operand.hbm [shape: f32[1,1], index: 2, kind: output, shape index: {}]
  %s3 = sld [smem:[#allocation0]]
  $region26: #{_vqvae_loss_impl.1} parent=0
    _
  %s5 = ssub.s32 1, %s3
  %s6 = scalar_select 0, %s5, %s3
  $region1: #{_vqvae_loss_impl.1} parent=0
    #allocation3 [shape = 'u8[512]{0}', space=smem, size = 0x200, scoped, tag = 'output window, operand 0, single buffered']
    #allocation4 [shape = 's32[1]{0}', space=sflag, size = 0x4, scoped, tag = 'scoped memory for _vqvae_loss_impl.1']
    %7 = vsyncpa [#allocation4], 0
    // Predicated region
    $region2: #{_vqvae_loss_impl.1} parent=1 // pred_check
      _
    $region3: #{_vqvae_loss_impl.1} parent=1 // pred_check_branch
      %9 = sbr.rel (0) target = $region5
    $region4: #{_vqvae_loss_impl.1} parent=1 // pred_region
      _
    $region5: #{_vqvae_loss_impl.1} parent=1 // pred_fallthru
      _
    // Predicated region
    $region6: #{_vqvae_loss_impl.1} parent=1 // pred_check
      _
    $region7: #{_vqvae_loss_impl.1} parent=1 // pred_check_branch
      %11 = sbr.rel (0) target = $region9
    $region8: #{_vqvae_loss_impl.1} parent=1 // pred_region
      _
    $region9: #{_vqvae_loss_impl.1} parent=1 // pred_fallthru
      _
    %p12 = scmp.eq.s32.totalorder 0, 0
    // Predicated region
    $region10: #{_vqvae_loss_impl.1} parent=1 // pred_check
      %p13 = pneg %p12
    $region11: #{_vqvae_loss_impl.1} parent=1 // pred_check_branch
      %15 = sbr.rel (%p13) target = $region13
    $region12: #{_vqvae_loss_impl.1} parent=1 // pred_region
      %16 = vst [vmem:[#allocation2] sm:$0xff] 0.0
    $region13: #{_vqvae_loss_impl.1} parent=1 // pred_fallthru
      _
    %v17 = vld [vmem:[%s0] sm:$0xff]
    %v18 = vld [vmem:[%s0 + $0x8] sm:$0xff]
    %v19 = vld [vmem:[%s1] sm:$0xff]
    %v20 = vld [vmem:[%s1 + $0x8] sm:$0xff]
    %v21 = vsub.f32 %v17, %v19
    %v22 = vsub.f32 %v18, %v20
    %v23 = vmul.f32 %v21, %v21
    %v24 = vmul.f32 %v22, %v22
    %v25 = vld [vmem:[#allocation2] sm:$0xff]
    %v26 = vadd.f32 %v23, %v24
    %v27 = vadd.f32 %v25, %v26
    %28 = vst [vmem:[#allocation2] sm:$0xff] %v27
    // Predicated region
    $region14: #{_vqvae_loss_impl.1} parent=1 // pred_check
      %p29 = pneg %p12
    $region15: #{_vqvae_loss_impl.1} parent=1 // pred_check_branch
      %31 = sbr.rel (%p29) target = $region17
    $region16: #{_vqvae_loss_impl.1} parent=1 // pred_region
      %v32 = vld [vmem:[#allocation2] sm:$0xff]
      %33 = vadd.xlane.f32.xlu0 %v32
      %v34 = vpop.xlane.xlu0 %33
      %v35 = vrot.slane %v34, 4
      %v36 = vadd.f32 %v34, %v35
      %v37 = vrot.slane %v36, 2
      %v38 = vadd.f32 %v36, %v37
      %v39 = vrot.slane %v38, 1
      %v40 = vadd.f32 %v38, %v39
      %s41 = vtos %v40
      %s42 = scalar_lea.smem [#allocation3], 0
      %43 = sst [smem:[%s42]] %s41
    $region17: #{_vqvae_loss_impl.1} parent=1 // pred_fallthru
      _
    // Predicated region
    $region18: #{_vqvae_loss_impl.1} parent=1 // pred_check
      _
    $region19: #{_vqvae_loss_impl.1} parent=1 // pred_check_branch
      %45 = sbr.rel (0) target = $region21
    $region20: #{_vqvae_loss_impl.1} parent=1 // pred_region
      %47 = vsyncadd [#allocation4], 0
      %s49 = sshll.u32 %s2, 4
      %s50 = int_to_ptr.hbm [resolvable:$true] %s49
      %52 = dma.smem_to_hbm [#allocation3], 16, %s50, [#allocation4]
    $region21: #{_vqvae_loss_impl.1} parent=1 // pred_fallthru
      _
    // Predicated region
    $region22: #{_vqvae_loss_impl.1} parent=1 // pred_check
      _
    $region23: #{_vqvae_loss_impl.1} parent=1 // pred_check_branch
      %54 = sbr.rel (0) target = $region25
    $region24: #{_vqvae_loss_impl.1} parent=1 // pred_region
      %56 = dma.done [#allocation4], 16
    $region25: #{_vqvae_loss_impl.1} parent=1 // pred_fallthru
      _
    %57 = sfence
    %58 = vsyncpa [#allocation4], 1

</llo_original>
